<compile_context>
chip_gen: v5e
topology: v5e:2x2
jax: 0.10.0
libtpu: 0.0.40
codegen_flags: <defaults>
</compile_context>

<pallas_src>
import dataclasses
import math

import jax
import jax.numpy as jnp
from jax.experimental import pallas as pl
from jax.experimental.pallas import tpu as pltpu


def _round_up(n: int, m: int) -> int:
    return ((n + m - 1) // m) * m


def _chip_defaults():
    """Per-generation (tm, th, vmem cap, #TCs) defaults."""
    try:
        kind = jax.devices()[0].device_kind.lower()
    except Exception:  # pragma: no cover
        kind = ""
    if "v7" in kind:
        return dict(tm=512, th=256, vmem_cap=48 << 20, num_cores=2)
    if "v6" in kind:
        return dict(tm=1024, th=512, vmem_cap=100 << 20, num_cores=1)
    if "v5" in kind:
        return dict(tm=512, th=512, vmem_cap=100 << 20, num_cores=1)
    return dict(tm=512, th=512, vmem_cap=64 << 20, num_cores=1)


# --------------------------------------------------------------------------- #
# Kernels
# --------------------------------------------------------------------------- #
def _t6mlp_kernel_direct(x_ref, w12_ref, wp_ref, o_ref):
    """f32 output: accumulate directly into the resident output tile."""
    j = pl.program_id(1)

    @pl.when(j == 0)
    def _():
        o_ref[...] = jnp.zeros_like(o_ref)

    th = w12_ref.shape[1] // 2
    x = x_ref[...]                                                     # (tm, dim_p)
    x12 = jnp.dot(x, w12_ref[...], preferred_element_type=jnp.float32)  # (tm, 2*th) f32
    x1 = x12[:, :th]
    x2 = x12[:, th:]
    h = (x1 * jax.nn.sigmoid(x1)) * x2                                 # SiLU gate, f32
    o_ref[...] += jnp.dot(h.astype(wp_ref.dtype), wp_ref[...],
                          preferred_element_type=jnp.float32)


def _t6mlp_kernel_scratch(x_ref, w12_ref, wp_ref, o_ref, acc_ref):
    """Narrow output dtype: accumulate in an f32 scratch, cast on the last step."""
    j = pl.program_id(1)

    @pl.when(j == 0)
    def _():
        acc_ref[...] = jnp.zeros_like(acc_ref)

    th = w12_ref.shape[1] // 2
    x = x_ref[...]
    x12 = jnp.dot(x, w12_ref[...], preferred_element_type=jnp.float32)
    x1 = x12[:, :th]
    x2 = x12[:, th:]
    h = (x1 * jax.nn.sigmoid(x1)) * x2
    acc_ref[...] += jnp.dot(h.astype(wp_ref.dtype), wp_ref[...],
                            preferred_element_type=jnp.float32)

    @pl.when(j == pl.num_programs(1) - 1)
    def _():
        o_ref[...] = acc_ref[...].astype(o_ref.dtype)


# --------------------------------------------------------------------------- #
# One-time weight preparation (hoisted out of the per-call hot path)
# --------------------------------------------------------------------------- #
@dataclasses.dataclass(frozen=True)
class T6MLPWeights:
    w12: jax.Array        # (dim_p, n_j * 2 * th): per-hidden-tile interleave [W1_j | W2_j]
    wp: jax.Array         # (hidden_p, dim_p)
    dim: int
    hidden: int
    dim_p: int
    hidden_p: int
    th: int
    compute_dtype: object


def t6mlp_prepare(w1_t, w2_t, wp_t, *, th=None, compute_dtype=jnp.bfloat16):
    """Cast / pad / fuse the weights once.

    w1_t, w2_t: [dim, hidden]; wp_t: [hidden, dim]  (pre-transposed vs nn.Linear).
    """
    defaults = _chip_defaults()
    if th is None:
        th = defaults["th"]

    dim, hidden = w1_t.shape
    dim_p = _round_up(dim, 128)
    th_eff = min(th, _round_up(hidden, 128))          # hidden tile (mult of 128)
    hidden_p = _round_up(hidden, th_eff)
    n_j = hidden_p // th_eff

    w1p = jnp.pad(w1_t.astype(compute_dtype),
                  ((0, dim_p - dim), (0, hidden_p - hidden)))
    w2p = jnp.pad(w2_t.astype(compute_dtype),
                  ((0, dim_p - dim), (0, hidden_p - hidden)))
    # Tile-interleaved fusion: block j (2*th columns) == [W1 tile j | W2 tile j].
    w12 = jnp.concatenate(
        [w1p.reshape(dim_p, n_j, th_eff), w2p.reshape(dim_p, n_j, th_eff)],
        axis=2,
    ).reshape(dim_p, n_j * 2 * th_eff)
    wpp = jnp.pad(wp_t.astype(compute_dtype),
                  ((0, hidden_p - hidden), (0, dim_p - dim)))

    return T6MLPWeights(w12=w12, wp=wpp, dim=dim, hidden=hidden,
                        dim_p=dim_p, hidden_p=hidden_p, th=th_eff,
                        compute_dtype=compute_dtype)


# --------------------------------------------------------------------------- #
# Wrapper
# --------------------------------------------------------------------------- #
def t6mlp_pallas_prepared(x, w: T6MLPWeights, *, tm=None):
    """x: [B, T, dim] -> [B, T, dim] using pre-fused/padded weights."""
    defaults = _chip_defaults()
    if tm is None:
        tm = defaults["tm"]
    vmem_cap = defaults["vmem_cap"]

    B, T, dim = x.shape
    assert dim == w.dim, "x feature dim does not match prepared weights"
    out_dtype = x.dtype
    M = B * T

    dim_p, hidden_p, th_eff = w.dim_p, w.hidden_p, w.th
    compute_dtype = w.compute_dtype
    bpe_c = jnp.dtype(compute_dtype).itemsize
    bpe_o = jnp.dtype(out_dtype).itemsize

    # ---- M tiling ----------------------------------------------------------
    tm_eff = min(tm, _round_up(M, 8))                 # row tile (mult of 8)
    # Megacore guard (v7x): make sure the "parallel" M axis has >= 2 tiles.
    if defaults["num_cores"] > 1 and _round_up(M, tm_eff) // tm_eff < 2 and tm_eff > 8:
        tm_eff = max(8, _round_up(tm_eff // 2, 8))
    Mp = _round_up(M, tm_eff)
    n_m = Mp // tm_eff
    n_j = hidden_p // th_eff

    x2d = x.reshape(M, dim).astype(compute_dtype)
    x2d = jnp.pad(x2d, ((0, Mp - M), (0, dim_p - dim)))

    # ---- kernel / scratch selection ----------------------------------------
    use_scratch = out_dtype != jnp.float32
    kernel = _t6mlp_kernel_scratch if use_scratch else _t6mlp_kernel_direct
    scratch_shapes = ([pltpu.VMEM((tm_eff, dim_p), jnp.float32)]
                      if use_scratch else [])

    # ---- VMEM budget (real sum + fixed headroom) ----------------------------
    vmem_bytes = (
        2 * tm_eff * dim_p * bpe_c               # x tile (double-buffered)
        + 2 * tm_eff * dim_p * bpe_o             # out tile (double-buffered)
        + 2 * dim_p * (2 * th_eff) * bpe_c       # fused W1|W2 tile (double-buffered)
        + 2 * th_eff * dim_p * bpe_c             # Wp tile (double-buffered)
        + (tm_eff * dim_p * 4 if use_scratch else 0)   # f32 accumulator scratch
        + tm_eff * (2 * th_eff) * 4              # x12 f32 intermediate
        + tm_eff * th_eff * 4                    # h (f32)
        + tm_eff * th_eff * bpe_c                # h cast to compute dtype
    )
    vmem_limit = int(min(max(vmem_bytes + (8 << 20), 32 << 20), vmem_cap))

    # ---- Cost estimate (weights streamed once per M tile) -------------------
    cost = pl.CostEstimate(
        flops=6 * Mp * dim_p * hidden_p,
        transcendentals=Mp * hidden_p,
        bytes_accessed=(Mp * dim_p * bpe_c
                        + n_m * 3 * dim_p * hidden_p * bpe_c
                        + Mp * dim_p * bpe_o),
    )

    out2d = pl.pallas_call(
        kernel,
        out_shape=jax.ShapeDtypeStruct((Mp, dim_p), out_dtype),
        grid_spec=pltpu.PrefetchScalarGridSpec(
            num_scalar_prefetch=0,
            grid=(n_m, n_j),
            in_specs=[
                pl.BlockSpec((tm_eff, dim_p), lambda i, j: (i, 0)),      # x rows
                pl.BlockSpec((dim_p, 2 * th_eff), lambda i, j: (0, j)),  # fused [W1|W2] tile
                pl.BlockSpec((th_eff, dim_p), lambda i, j: (j, 0)),      # Wp tile
            ],
            out_specs=pl.BlockSpec((tm_eff, dim_p), lambda i, j: (i, 0)),
            scratch_shapes=scratch_shapes,
        ),
        compiler_params=pltpu.CompilerParams(
            dimension_semantics=("parallel", "arbitrary"),
            vmem_limit_bytes=vmem_limit,
        ),
        cost_estimate=cost,
    )(x2d, w.w12, w.wp)

    return out2d[:M, :dim].reshape(B, T, dim)


def t6mlp_pallas(x, w1_t, w2_t, wp_t, *, tm=None, th=None,
                 compute_dtype=jnp.bfloat16):
    """One-shot convenience wrapper (prepares weights every call; prefer
    t6mlp_prepare + t6mlp_pallas_prepared in a real model)."""
    prepared = t6mlp_prepare(w1_t, w2_t, wp_t, th=th, compute_dtype=compute_dtype)
    return t6mlp_pallas_prepared(x, prepared, tm=tm)


# --------------------------------------------------------------------------- #
# Pure-JAX reference
# --------------------------------------------------------------------------- #
def t6mlp_ref(x, w1_t, w2_t, wp_t, compute_dtype=jnp.float32):
    xc = x.astype(compute_dtype)
    x1 = jnp.einsum("btd,dh->bth", xc, w1_t.astype(compute_dtype),
                    preferred_element_type=jnp.float32)
    x2 = jnp.einsum("btd,dh->bth", xc, w2_t.astype(compute_dtype),
                    preferred_element_type=jnp.float32)
    h = (x1 * jax.nn.sigmoid(x1)) * x2
    out = jnp.einsum("bth,hd->btd", h.astype(compute_dtype),
                     wp_t.astype(compute_dtype),
                     preferred_element_type=jnp.float32)
    return out.astype(x.dtype)


if __name__ == "__main__":
    # Small shapes consistent with the module: dim=96 -> hidden=floor(8/3*96)=256
    B, T, dim = 2, 8, 96
    hidden = math.floor(8 / 3 * dim)

    key = jax.random.PRNGKey(0)
    kx, k1, k2, k3 = jax.random.split(key, 4)
    x = jax.random.normal(kx, (B, T, dim), dtype=jnp.float32)

    # Deterministic synthetic weights, already transposed ([in, out]) relative
    # to nn.Linear's [out, in].
    # NOTE: the PyTorch __init__ zeroes c_proj.weight (output would be all
    # zeros); we use nonzero values here so the test exercises the full path.
    w1_t = jax.random.normal(k1, (dim, hidden), dtype=jnp.float32) / math.sqrt(dim)
    w2_t = jax.random.normal(k2, (dim, hidden), dtype=jnp.float32) / math.sqrt(dim)
    wp_t = jax.random.normal(k3, (hidden, dim), dtype=jnp.float32) / math.sqrt(hidden)

    # Weight cast/pad/fusion hoisted out of the hot path: done exactly once.
    prepared = t6mlp_prepare(w1_t, w2_t, wp_t)
    out = t6mlp_pallas_prepared(x, prepared)
    out = jax.block_until_ready(out)

    assert out.shape == (B, T, dim)
    assert out.dtype == x.dtype

    # Reference on the same bf16-matmul / f32-accumulate path: tight tolerance.
    ref_bf16 = t6mlp_ref(x, w1_t, w2_t, wp_t, compute_dtype=jnp.bfloat16)
    assert jnp.allclose(out, ref_bf16, atol=1e-2, rtol=1e-2), "mismatch vs bf16 ref"

    # Full f32 reference: loose tolerance (bf16 matmul rounding only).
    ref_f32 = t6mlp_ref(x, w1_t, w2_t, wp_t, compute_dtype=jnp.float32)
    assert jnp.allclose(out, ref_f32, atol=2e-1, rtol=1e-1), "mismatch vs f32 ref"

    print("KERNEL_OK")
</pallas_src>

<mosaic_0001>
module attributes {stable_mosaic.version = 11 : i64} {
  func.func @_t6mlp_kernel_direct(%arg0: i32, %arg1: i32, %arg2: memref<16x128xbf16, #tpu.memory_space<vmem>>, %arg3: memref<128x512xbf16, #tpu.memory_space<vmem>>, %arg4: memref<256x128xbf16, #tpu.memory_space<vmem>>, %arg5: memref<16x128xf32, #tpu.memory_space<vmem>>) attributes {dimension_semantics = [#tpu.dimension_semantics<parallel>, #tpu.dimension_semantics<arbitrary>], iteration_bounds = array<i64: 1, 1>, scalar_prefetch = 0 : i64, scratch_operands = 0 : i64, tpu.core_type = #tpu.core_type<tc>, window_params = [{transform_indices = @transform_0, window_bounds = array<i64: 16, 128>}, {transform_indices = @transform_1, window_bounds = array<i64: 128, 512>}, {transform_indices = @transform_2, window_bounds = array<i64: 256, 128>}, {transform_indices = @transform_3, window_bounds = array<i64: 16, 128>}]} {
    %c0_i32 = arith.constant 0 : i32
    %0 = arith.cmpi eq, %arg1, %c0_i32 : i32
    %1 = arith.extui %0 : i1 to i32
    %c0_i32_0 = arith.constant 0 : i32
    %2 = arith.cmpi ne, %1, %c0_i32_0 : i32
    scf.if %2 {
      %cst_12 = arith.constant 0.000000e+00 : f32
      %21 = vector.broadcast %cst_12 : f32 to vector<16x128xf32>
      %c0_13 = arith.constant 0 : index
      %c0_14 = arith.constant 0 : index
      %22 = vector.load %arg5[%c0_13, %c0_14] : memref<16x128xf32, #tpu.memory_space<vmem>>, vector<16x128xf32>
      tpu.vector_store %arg5[%c0_13, %c0_14], %21 {strides = array<i32>} : memref<16x128xf32, #tpu.memory_space<vmem>>, vector<16x128xf32>,
    } else {
    }
    %c0 = arith.constant 0 : index
    %c0_1 = arith.constant 0 : index
    %3 = vector.load %arg2[%c0, %c0_1] : memref<16x128xbf16, #tpu.memory_space<vmem>>, vector<16x128xbf16>
    %c0_2 = arith.constant 0 : index
    %c0_3 = arith.constant 0 : index
    %4 = vector.load %arg3[%c0_2, %c0_3] : memref<128x512xbf16, #tpu.memory_space<vmem>>, vector<128x512xbf16>
    %cst = arith.constant dense<0.000000e+00> : vector<16x512xf32>
    %5 = tpu.matmul %3, %4, %cst {dimension_numbers = #tpu.dot_dimension_numbers<[1], [0], [0], [1], [0, 0, 1, 1], [], []>} : vector<16x128xbf16>, vector<128x512xbf16>, vector<16x512xf32> -> vector<16x512xf32>
    %6 = vector.extract_strided_slice %5 {offsets = [0, 0], sizes = [16, 256], strides = [1, 1]} : vector<16x512xf32> to vector<16x256xf32>
    %7 = vector.extract_strided_slice %5 {offsets = [0, 256], sizes = [16, 256], strides = [1, 1]} : vector<16x512xf32> to vector<16x256xf32>
    %8 = arith.negf %6 : vector<16x256xf32>
    %9 = math.exp %8 : vector<16x256xf32>
    %cst_4 = arith.constant 1.000000e+00 : f32
    %10 = vector.broadcast %cst_4 : f32 to vector<16x256xf32>
    %11 = arith.addf %10, %9 : vector<16x256xf32>
    %12 = arith.divf %10, %11 : vector<16x256xf32>
    %13 = arith.mulf %6, %12 : vector<16x256xf32>
    %14 = arith.mulf %13, %7 : vector<16x256xf32>
    %c0_5 = arith.constant 0 : index
    %c0_6 = arith.constant 0 : index
    %15 = vector.load %arg5[%c0_5, %c0_6] : memref<16x128xf32, #tpu.memory_space<vmem>>, vector<16x128xf32>
    %16 = arith.truncf %14 : vector<16x256xf32> to vector<16x256xbf16>
    %c0_7 = arith.constant 0 : index
    %c0_8 = arith.constant 0 : index
    %17 = vector.load %arg4[%c0_7, %c0_8] : memref<256x128xbf16, #tpu.memory_space<vmem>>, vector<256x128xbf16>
    %cst_9 = arith.constant dense<0.000000e+00> : vector<16x128xf32>
    %18 = tpu.matmul %16, %17, %cst_9 {dimension_numbers = #tpu.dot_dimension_numbers<[1], [0], [0], [1], [0, 0, 1, 1], [], []>} : vector<16x256xbf16>, vector<256x128xbf16>, vector<16x128xf32> -> vector<16x128xf32>
    %19 = arith.addf %15, %18 : vector<16x128xf32>
    %c0_10 = arith.constant 0 : index
    %c0_11 = arith.constant 0 : index
    %20 = vector.load %arg5[%c0_10, %c0_11] : memref<16x128xf32, #tpu.memory_space<vmem>>, vector<16x128xf32>
    tpu.vector_store %arg5[%c0_10, %c0_11], %19 {strides = array<i32>} : memref<16x128xf32, #tpu.memory_space<vmem>>, vector<16x128xf32>,
    return
  }
  func.func @transform_0(%arg0: i32, %arg1: i32) -> (i32, i32) {
    %c0_i32 = arith.constant 0 : i32
    %c0_i32_0 = arith.constant 0 : i32
    return %arg0, %c0_i32 : i32, i32
  }
  func.func @transform_1(%arg0: i32, %arg1: i32) -> (i32, i32) {
    %c0_i32 = arith.constant 0 : i32
    %c0_i32_0 = arith.constant 0 : i32
    return %c0_i32, %arg1 : i32, i32
  }
  func.func @transform_2(%arg0: i32, %arg1: i32) -> (i32, i32) {
    %c0_i32 = arith.constant 0 : i32
    %c0_i32_0 = arith.constant 0 : i32
    return %arg1, %c0_i32 : i32, i32
  }
  func.func @transform_3(%arg0: i32, %arg1: i32) -> (i32, i32) {
    %c0_i32 = arith.constant 0 : i32
    %c0_i32_0 = arith.constant 0 : i32
    return %arg0, %c0_i32 : i32, i32
  }
}

</mosaic_0001>

<llo_original>
// kernel: tpu_custom_call.1
$region0: #{tpu_custom_call.1}
  #allocation0 [shape = 'u32[]', space=smem, size = 0x4, offset = 0x4, fixed_abs, tag = 'smem constant byte address 0x4 - core index']
  #allocation1 [shape = 'u32[72,128]{1,0:T(1,128)}', space=vmem, size = 0x9000, scoped, tag = 'internal scratch']
  %s0 = inlined_call_operand.hbm [shape: bf16[16,128], index: 0, kind: input, shape index: {}]
  %s1 = inlined_call_operand.hbm [shape: bf16[128,512], index: 1, kind: input, shape index: {}]
  %s2 = inlined_call_operand.hbm [shape: bf16[256,128], index: 2, kind: input, shape index: {}]
  %s3 = inlined_call_operand.hbm [shape: f32[16,128], index: 3, kind: output, shape index: {}]
  %s4 = sld [smem:[#allocation0]]
  $region38: #{tpu_custom_call.1} parent=0
    _
  %s6 = ssub.s32 1, %s4
  %s7 = scalar_select 0, %s6, %s4
  $region1: #{tpu_custom_call.1} parent=0
    #allocation2 [shape = 'u8[4096]{0}', space=vmem, size = 0x1000, scoped, tag = 'input window, operand 0, single buffered']
    #allocation3 [shape = 's32[1]{0}', space=sflag, size = 0x4, scoped, tag = 'scoped memory for tpu_custom_call.1']
    #allocation4 [shape = 's32[1]{0}', space=sflag, size = 0x4, scoped, tag = 'scoped memory for tpu_custom_call.1']
    #allocation5 [shape = 'u8[131072]{0}', space=vmem, size = 0x20000, scoped, tag = 'input window, operand 1, single buffered']
    #allocation6 [shape = 's32[1]{0}', space=sflag, size = 0x4, scoped, tag = 'scoped memory for tpu_custom_call.1']
    #allocation7 [shape = 'u8[65536]{0}', space=vmem, size = 0x10000, scoped, tag = 'input window, operand 2, single buffered']
    #allocation8 [shape = 'u8[8192]{0}', space=vmem, size = 0x2000, scoped, tag = 'output window, operand 0, single buffered']
    %8 = vsyncpa [#allocation3], 0
    %9 = vsyncpa [#allocation6], 0
    %10 = vsyncpa [#allocation4], 0
    // Predicated region
    $region2: #{tpu_custom_call.1} parent=1 // pred_check
      _
    $region3: #{tpu_custom_call.1} parent=1 // pred_check_branch
      %12 = sbr.rel (0) target = $region5
    $region4: #{tpu_custom_call.1} parent=1 // pred_region
      %14 = vsyncadd [#allocation3], 0
      %s15 = sshll.u32 %s0, 4
      %s16 = int_to_ptr.hbm [resolvable:$true] %s15
      %s17 = sshll.u32 [#allocation2], 4
      %s18 = int_to_ptr.vmem [resolvable:$true] %s17
      %23 = dma.hbm_to_vmem [thread:$0]  %s16, 128, %s18, [#allocation3], 64, 64, 4
    $region5: #{tpu_custom_call.1} parent=1 // pred_fallthru
      _
    // Predicated region
    $region6: #{tpu_custom_call.1} parent=1 // pred_check
      _
    $region7: #{tpu_custom_call.1} parent=1 // pred_check_branch
      %25 = sbr.rel (0) target = $region9
    $region8: #{tpu_custom_call.1} parent=1 // pred_region
      %27 = vsyncadd [#allocation6], 0
      %s28 = sshll.u32 %s1, 4
      %s29 = int_to_ptr.hbm [resolvable:$true] %s28
      %s30 = sshll.u32 [#allocation5], 4
      %s31 = int_to_ptr.vmem [resolvable:$true] %s30
      %36 = dma.hbm_to_vmem [thread:$0]  %s29, 4096, %s31, [#allocation6], 256, 256, 16
    $region9: #{tpu_custom_call.1} parent=1 // pred_fallthru
      _
    // Predicated region
    $region10: #{tpu_custom_call.1} parent=1 // pred_check
      _
    $region11: #{tpu_custom_call.1} parent=1 // pred_check_branch
      %38 = sbr.rel (0) target = $region13
    $region12: #{tpu_custom_call.1} parent=1 // pred_region
      %40 = vsyncadd [#allocation6], 0
      %s41 = sshll.u32 %s2, 4
      %s42 = int_to_ptr.hbm [resolvable:$true] %s41
      %s43 = sshll.u32 [#allocation7], 4
      %s44 = int_to_ptr.vmem [resolvable:$true] %s43
      %49 = dma.hbm_to_vmem [thread:$0]  %s42, 2048, %s44, [#allocation6], 64, 64, 4
    $region13: #{tpu_custom_call.1} parent=1 // pred_fallthru
      _
    // Predicated region
    $region14: #{tpu_custom_call.1} parent=1 // pred_check
      _
    $region15: #{tpu_custom_call.1} parent=1 // pred_check_branch
      %51 = sbr.rel (0) target = $region17
    $region16: #{tpu_custom_call.1} parent=1 // pred_region
      %53 = dma.done [#allocation3], 128
    $region17: #{tpu_custom_call.1} parent=1 // pred_fallthru
      _
    // Predicated region
    $region18: #{tpu_custom_call.1} parent=1 // pred_check
      _
    $region19: #{tpu_custom_call.1} parent=1 // pred_check_branch
      %55 = sbr.rel (0) target = $region21
    $region20: #{tpu_custom_call.1} parent=1 // pred_region
      %57 = dma.done [#allocation6], 4096
    $region21: #{tpu_custom_call.1} parent=1 // pred_fallthru
      _
    // Predicated region
    $region22: #{tpu_custom_call.1} parent=1 // pred_check
      _
    $region23: #{tpu_custom_call.1} parent=1 // pred_check_branch
      %59 = sbr.rel (0) target = $region25
    $region24: #{tpu_custom_call.1} parent=1 // pred_region
      %61 = dma.done [#allocation6], 2048
    $region25: #{tpu_custom_call.1} parent=1 // pred_fallthru
      _
    %p62 = scmp.eq.s32.totalorder 0, 0
    // Predicated region
    $region26: #{tpu_custom_call.1} parent=1 // pred_check
      %p63 = pneg %p62
    $region27: #{tpu_custom_call.1} parent=1 // pred_check_branch
      %65 = sbr.rel (%p63) target = $region29
    $region28: #{tpu_custom_call.1} parent=1 // pred_region
      %66 = vst [vmem:[#allocation8] sm:$0xff] 0.0
      %67 = vst [vmem:[#allocation8 + $0x8] sm:$0xff] 0.0
    $region29: #{tpu_custom_call.1} parent=1 // pred_fallthru
      _
    %v68 = vld [vmem:[#allocation2] sm:$0xf]
    %v69 = vld [vmem:[#allocation2 + $0x4] sm:$0xf]
    %v70 = vld [vmem:[#allocation5] sm:$0xff]
    %v71 = vld [vmem:[#allocation5 + $0x8] sm:$0xff]
    %v72 = vld [vmem:[#allocation5 + $0x10] sm:$0xff]
    %v73 = vld [vmem:[#allocation5 + $0x18] sm:$0xff]
    %v74 = vld [vmem:[#allocation5 + $0x20] sm:$0xff]
    %v75 = vld [vmem:[#allocation5 + $0x28] sm:$0xff]
    %v76 = vld [vmem:[#allocation5 + $0x30] sm:$0xff]
    %v77 = vld [vmem:[#allocation5 + $0x38] sm:$0xff]
    %v78 = vld [vmem:[#allocation5 + $0x40] sm:$0xff]
    %v79 = vld [vmem:[#allocation5 + $0x48] sm:$0xff]
    %v80 = vld [vmem:[#allocation5 + $0x50] sm:$0xff]
    %v81 = vld [vmem:[#allocation5 + $0x58] sm:$0xff]
    %v82 = vld [vmem:[#allocation5 + $0x60] sm:$0xff]
    %v83 = vld [vmem:[#allocation5 + $0x68] sm:$0xff]
    %v84 = vld [vmem:[#allocation5 + $0x70] sm:$0xff]
    %v85 = vld [vmem:[#allocation5 + $0x78] sm:$0xff]
    %v86 = vld [vmem:[#allocation5 + $0x80] sm:$0xff]
    %v87 = vld [vmem:[#allocation5 + $0x88] sm:$0xff]
    %v88 = vld [vmem:[#allocation5 + $0x90] sm:$0xff]
    %v89 = vld [vmem:[#allocation5 + $0x98] sm:$0xff]
    %v90 = vld [vmem:[#allocation5 + $0xa0] sm:$0xff]
    %v91 = vld [vmem:[#allocation5 + $0xa8] sm:$0xff]
    %v92 = vld [vmem:[#allocation5 + $0xb0] sm:$0xff]
    %v93 = vld [vmem:[#allocation5 + $0xb8] sm:$0xff]
    %v94 = vld [vmem:[#allocation5 + $0xc0] sm:$0xff]
    %v95 = vld [vmem:[#allocation5 + $0xc8] sm:$0xff]
    %v96 = vld [vmem:[#allocation5 + $0xd0] sm:$0xff]
    %v97 = vld [vmem:[#allocation5 + $0xd8] sm:$0xff]
    %v98 = vld [vmem:[#allocation5 + $0xe0] sm:$0xff]
    %v99 = vld [vmem:[#allocation5 + $0xe8] sm:$0xff]
    %v100 = vld [vmem:[#allocation5 + $0xf0] sm:$0xff]
    %v101 = vld [vmem:[#allocation5 + $0xf8] sm:$0xff]
    %v104 = vunpack.c.l.b16 %v68
    %v105 = vunpack.c.l.b16 %v69
    %v106 = vpack.c.b16 %v105, %v104
    %v140 = vunpack.c.l.b16 %v70
    %v141 = vunpack.c.h.b16 %v70
    %v142 = vunpack.c.l.b16 %v71
    %v143 = vunpack.c.h.b16 %v71
    %v144 = vunpack.c.l.b16 %v72
    %v145 = vunpack.c.h.b16 %v72
    %v146 = vunpack.c.l.b16 %v73
    %v147 = vunpack.c.h.b16 %v73
    %v148 = vunpack.c.l.b16 %v74
    %v149 = vunpack.c.h.b16 %v74
    %v150 = vunpack.c.l.b16 %v75
    %v151 = vunpack.c.h.b16 %v75
    %v152 = vunpack.c.l.b16 %v76
    %v153 = vunpack.c.h.b16 %v76
    %v154 = vunpack.c.l.b16 %v77
    %v155 = vunpack.c.h.b16 %v77
    %v156 = vunpack.c.l.b16 %v78
    %v157 = vunpack.c.h.b16 %v78
    %v158 = vunpack.c.l.b16 %v79
    %v159 = vunpack.c.h.b16 %v79
    %v160 = vunpack.c.l.b16 %v80
    %v161 = vunpack.c.h.b16 %v80
    %v162 = vunpack.c.l.b16 %v81
    %v163 = vunpack.c.h.b16 %v81
    %v164 = vunpack.c.l.b16 %v82
    %v165 = vunpack.c.h.b16 %v82
    %v166 = vunpack.c.l.b16 %v83
    %v167 = vunpack.c.h.b16 %v83
    %v168 = vunpack.c.l.b16 %v84
    %v169 = vunpack.c.h.b16 %v84
    %v170 = vunpack.c.l.b16 %v85
    %v171 = vunpack.c.h.b16 %v85
    %v172 = vunpack.c.l.b16 %v86
    %v173 = vunpack.c.h.b16 %v86
    %v174 = vunpack.c.l.b16 %v87
    %v175 = vunpack.c.h.b16 %v87
    %v176 = vunpack.c.l.b16 %v88
    %v177 = vunpack.c.h.b16 %v88
    %v178 = vunpack.c.l.b16 %v89
    %v179 = vunpack.c.h.b16 %v89
    %v180 = vunpack.c.l.b16 %v90
    %v181 = vunpack.c.h.b16 %v90
    %v182 = vunpack.c.l.b16 %v91
    %v183 = vunpack.c.h.b16 %v91
    %v184 = vunpack.c.l.b16 %v92
    %v185 = vunpack.c.h.b16 %v92
    %v186 = vunpack.c.l.b16 %v93
    %v187 = vunpack.c.h.b16 %v93
    %v188 = vunpack.c.l.b16 %v94
    %v189 = vunpack.c.h.b16 %v94
    %v190 = vunpack.c.l.b16 %v95
    %v191 = vunpack.c.h.b16 %v95
    %v192 = vunpack.c.l.b16 %v96
    %v193 = vunpack.c.h.b16 %v96
    %v194 = vunpack.c.l.b16 %v97
    %v195 = vunpack.c.h.b16 %v97
    %v196 = vunpack.c.l.b16 %v98
    %v197 = vunpack.c.h.b16 %v98
    %v198 = vunpack.c.l.b16 %v99
    %v199 = vunpack.c.h.b16 %v99
    %v200 = vunpack.c.l.b16 %v100
    %v201 = vunpack.c.h.b16 %v100
    %v202 = vunpack.c.l.b16 %v101
    %v203 = vunpack.c.h.b16 %v101
    %v204 = vpack.c.b16 %v144, %v140
    %v205 = vpack.c.b16 %v145, %v141
    %v206 = vpack.c.b16 %v146, %v142
    %v207 = vpack.c.b16 %v147, %v143
    %v208 = vpack.c.b16 %v152, %v148
    %v209 = vpack.c.b16 %v153, %v149
    %v210 = vpack.c.b16 %v154, %v150
    %v211 = vpack.c.b16 %v155, %v151
    %v212 = vpack.c.b16 %v160, %v156
    %v213 = vpack.c.b16 %v161, %v157
    %v214 = vpack.c.b16 %v162, %v158
    %v215 = vpack.c.b16 %v163, %v159
    %v216 = vpack.c.b16 %v168, %v164
    %v217 = vpack.c.b16 %v169, %v165
    %v218 = vpack.c.b16 %v170, %v166
    %v219 = vpack.c.b16 %v171, %v167
    %v220 = vpack.c.b16 %v176, %v172
    %v221 = vpack.c.b16 %v177, %v173
    %v222 = vpack.c.b16 %v178, %v174
    %v223 = vpack.c.b16 %v179, %v175
    %v224 = vpack.c.b16 %v184, %v180
    %v225 = vpack.c.b16 %v185, %v181
    %v226 = vpack.c.b16 %v186, %v182
    %v227 = vpack.c.b16 %v187, %v183
    %v228 = vpack.c.b16 %v192, %v188
    %v229 = vpack.c.b16 %v193, %v189
    %v230 = vpack.c.b16 %v194, %v190
    %v231 = vpack.c.b16 %v195, %v191
    %v232 = vpack.c.b16 %v200, %v196
    %v233 = vpack.c.b16 %v201, %v197
    %v234 = vpack.c.b16 %v202, %v198
    %v235 = vpack.c.b16 %v203, %v199
    %268 = vmatpush.bf16.msra.mxu0 %v232
    %269 = vmatpush.bf16.msra.mxu0 %v228
    %270 = vmatpush.bf16.msra.mxu0 %v224
    %271 = vmatpush.bf16.msra.mxu0 %v220
    %272 = vmatpush.bf16.msra.mxu0 %v216
    %273 = vmatpush.bf16.msra.mxu0 %v212
    %274 = vmatpush.bf16.msra.mxu0 %v208
    %275 = vmatpush.bf16.msra.mxu0 %v204
    %276 = vmatmul.bf16.gmra.mxu0 %v106
    %v277 = vpop.f32.mrf.mxu0
    %v278 = vadd.f32 0.0, %v277
    %v279 = vpop.f32.mrf.mxu0
    %v280 = vadd.f32 0.0, %v279
    %281 = vdwg.mxu0
    %282 = vmatpush.bf16.msra.mxu0 %v233
    %283 = vmatpush.bf16.msra.mxu0 %v229
    %284 = vmatpush.bf16.msra.mxu0 %v225
    %285 = vmatpush.bf16.msra.mxu0 %v221
    %286 = vmatpush.bf16.msra.mxu0 %v217
    %287 = vmatpush.bf16.msra.mxu0 %v213
    %288 = vmatpush.bf16.msra.mxu0 %v209
    %289 = vmatpush.bf16.msra.mxu0 %v205
    %290 = vmatmul.bf16.gmra.mxu0 %v106
    %v291 = vpop.f32.mrf.mxu0
    %v292 = vadd.f32 0.0, %v291
    %v293 = vpop.f32.mrf.mxu0
    %v294 = vadd.f32 0.0, %v293
    %295 = vdwg.mxu0
    %296 = vmatpush.bf16.msra.mxu0 %v234
    %297 = vmatpush.bf16.msra.mxu0 %v230
    %298 = vmatpush.bf16.msra.mxu0 %v226
    %299 = vmatpush.bf16.msra.mxu0 %v222
    %300 = vmatpush.bf16.msra.mxu0 %v218
    %301 = vmatpush.bf16.msra.mxu0 %v214
    %302 = vmatpush.bf16.msra.mxu0 %v210
    %303 = vmatpush.bf16.msra.mxu0 %v206
    %304 = vmatmul.bf16.gmra.mxu0 %v106
    %v305 = vpop.f32.mrf.mxu0
    %v306 = vadd.f32 0.0, %v305
    %v307 = vpop.f32.mrf.mxu0
    %v308 = vadd.f32 0.0, %v307
    %309 = vdwg.mxu0
    %310 = vmatpush.bf16.msra.mxu0 %v235
    %311 = vmatpush.bf16.msra.mxu0 %v231
    %312 = vmatpush.bf16.msra.mxu0 %v227
    %313 = vmatpush.bf16.msra.mxu0 %v223
    %314 = vmatpush.bf16.msra.mxu0 %v219
    %315 = vmatpush.bf16.msra.mxu0 %v215
    %316 = vmatpush.bf16.msra.mxu0 %v211
    %317 = vmatpush.bf16.msra.mxu0 %v207
    %318 = vmatmul.bf16.gmra.mxu0 %v106
    %v319 = vpop.f32.mrf.mxu0
    %v320 = vadd.f32 0.0, %v319
    %v321 = vpop.f32.mrf.mxu0
    %v322 = vadd.f32 0.0, %v321
    %323 = vdwg.mxu0
    %v324 = vxor.u32 %v278, 2147483648
    %v325 = vxor.u32 %v292, 2147483648
    %v326 = vxor.u32 %v280, 2147483648
    %v327 = vxor.u32 %v294, 2147483648
    %v328 = vmul.f32 %v324, 1.442695
    %v329 = vpow.pop %v328
    %v330 = vmul.f32 %v325, 1.442695
    %v331 = vpow.pop %v330
    %v332 = vmul.f32 %v326, 1.442695
    %v333 = vpow.pop %v332
    %v334 = vmul.f32 %v327, 1.442695
    %v335 = vpow.pop %v334
    %v336 = vadd.f32 %v329, 1.0
    %v337 = vadd.f32 %v331, 1.0
    %v338 = vadd.f32 %v333, 1.0
    %v339 = vadd.f32 %v335, 1.0
    %v340 = vrcp.pop %v336
    %v341 = vmul.f32 %v336, %v340
    %v342 = vsub.f32 1.0, %v341
    %v343 = vmul.f32 %v340, %v342
    %v344 = vadd.f32 %v340, %v343
    %vm345 = vweird.f32 %v336
    %vm346 = vweird.f32 %v340
    %vm347 = vmor %vm345, %vm346
    %v348 = vsel %vm347, %v340, %v344
    %v349 = vand.u32 2147483647, %v336
    %vm350 = vcmp.eq.f32.partialorder %v349, 8.507059e+37
    %v351 = vand.u32 %v336, 2147483648
    %v352 = vor.u32 1.1754944e-38, %v351
    %v353 = vsel %vm350, %v352, %v348
    %v354 = vmul.f32 1.0, %v353
    %v355 = vrcp.pop %v337
    %v356 = vmul.f32 %v337, %v355
    %v357 = vsub.f32 1.0, %v356
    %v358 = vmul.f32 %v355, %v357
    %v359 = vadd.f32 %v355, %v358
    %vm360 = vweird.f32 %v337
    %vm361 = vweird.f32 %v355
    %vm362 = vmor %vm360, %vm361
    %v363 = vsel %vm362, %v355, %v359
    %v364 = vand.u32 2147483647, %v337
    %vm365 = vcmp.eq.f32.partialorder %v364, 8.507059e+37
    %v366 = vand.u32 %v337, 2147483648
    %v367 = vor.u32 1.1754944e-38, %v366
    %v368 = vsel %vm365, %v367, %v363
    %v369 = vmul.f32 1.0, %v368
    %v370 = vrcp.pop %v338
    %v371 = vmul.f32 %v338, %v370
    %v372 = vsub.f32 1.0, %v371
    %v373 = vmul.f32 %v370, %v372
    %v374 = vadd.f32 %v370, %v373
    %vm375 = vweird.f32 %v338
    %vm376 = vweird.f32 %v370
    %vm377 = vmor %vm375, %vm376
    %v378 = vsel %vm377, %v370, %v374
    %v379 = vand.u32 2147483647, %v338
    %vm380 = vcmp.eq.f32.partialorder %v379, 8.507059e+37
    %v381 = vand.u32 %v338, 2147483648
    %v382 = vor.u32 1.1754944e-38, %v381
    %v383 = vsel %vm380, %v382, %v378
    %v384 = vmul.f32 1.0, %v383
    %v385 = vrcp.pop %v339
    %v386 = vmul.f32 %v339, %v385
    %v387 = vsub.f32 1.0, %v386
    %v388 = vmul.f32 %v385, %v387
    %v389 = vadd.f32 %v385, %v388
    %vm390 = vweird.f32 %v339
    %vm391 = vweird.f32 %v385
    %vm392 = vmor %vm390, %vm391
    %v393 = vsel %vm392, %v385, %v389
    %v394 = vand.u32 2147483647, %v339
    %vm395 = vcmp.eq.f32.partialorder %v394, 8.507059e+37
    %v396 = vand.u32 %v339, 2147483648
    %v397 = vor.u32 1.1754944e-38, %v396
    %v398 = vsel %vm395, %v397, %v393
    %v399 = vmul.f32 1.0, %v398
    %v400 = vmul.f32 %v278, %v354
    %v401 = vmul.f32 %v292, %v369
    %v402 = vmul.f32 %v280, %v384
    %v403 = vmul.f32 %v294, %v399
    %v404 = vmul.f32 %v400, %v306
    %v405 = vmul.f32 %v401, %v320
    %v406 = vmul.f32 %v402, %v308
    %v407 = vmul.f32 %v403, %v322
    %v408 = vld [vmem:[#allocation8] sm:$0xff]
    %v409 = vld [vmem:[#allocation8 + $0x8] sm:$0xff]
    %v410 = vpack.c.bf16 %v406, %v404
    %v411 = vpack.c.bf16 %v407, %v405
    %v412 = vld [vmem:[#allocation7] sm:$0xf]
    %v413 = vld [vmem:[#allocation7 + $0x4] sm:$0xf]
    %v414 = vld [vmem:[#allocation7 + $0x8] sm:$0xf]
    %v415 = vld [vmem:[#allocation7 + $0xc] sm:$0xf]
    %v416 = vld [vmem:[#allocation7 + $0x10] sm:$0xf]
    %v417 = vld [vmem:[#allocation7 + $0x14] sm:$0xf]
    %v418 = vld [vmem:[#allocation7 + $0x18] sm:$0xf]
    %v419 = vld [vmem:[#allocation7 + $0x1c] sm:$0xf]
    %v420 = vld [vmem:[#allocation7 + $0x20] sm:$0xf]
    %v421 = vld [vmem:[#allocation7 + $0x24] sm:$0xf]
    %v422 = vld [vmem:[#allocation7 + $0x28] sm:$0xf]
    %v423 = vld [vmem:[#allocation7 + $0x2c] sm:$0xf]
    %v424 = vld [vmem:[#allocation7 + $0x30] sm:$0xf]
    %v425 = vld [vmem:[#allocation7 + $0x34] sm:$0xf]
    %v426 = vld [vmem:[#allocation7 + $0x38] sm:$0xf]
    %v427 = vld [vmem:[#allocation7 + $0x3c] sm:$0xf]
    %v428 = vld [vmem:[#allocation7 + $0x40] sm:$0xf]
    %v429 = vld [vmem:[#allocation7 + $0x44] sm:$0xf]
    %v430 = vld [vmem:[#allocation7 + $0x48] sm:$0xf]
    %v431 = vld [vmem:[#allocation7 + $0x4c] sm:$0xf]
    %v432 = vld [vmem:[#allocation7 + $0x50] sm:$0xf]
    %v433 = vld [vmem:[#allocation7 + $0x54] sm:$0xf]
    %v434 = vld [vmem:[#allocation7 + $0x58] sm:$0xf]
    %v435 = vld [vmem:[#allocation7 + $0x5c] sm:$0xf]
    %v436 = vld [vmem:[#allocation7 + $0x60] sm:$0xf]
    %v437 = vld [vmem:[#allocation7 + $0x64] sm:$0xf]
    %v438 = vld [vmem:[#allocation7 + $0x68] sm:$0xf]
    %v439 = vld [vmem:[#allocation7 + $0x6c] sm:$0xf]
    %v440 = vld [vmem:[#allocation7 + $0x70] sm:$0xf]
    %v441 = vld [vmem:[#allocation7 + $0x74] sm:$0xf]
    %v442 = vld [vmem:[#allocation7 + $0x78] sm:$0xf]
    %v443 = vld [vmem:[#allocation7 + $0x7c] sm:$0xf]
    %v476 = vunpack.c.l.b16 %v412
    %v477 = vunpack.c.l.b16 %v413
    %v478 = vunpack.c.l.b16 %v414
    %v479 = vunpack.c.l.b16 %v415
    %v480 = vunpack.c.l.b16 %v416
    %v481 = vunpack.c.l.b16 %v417
    %v482 = vunpack.c.l.b16 %v418
    %v483 = vunpack.c.l.b16 %v419
    %v484 = vunpack.c.l.b16 %v420
    %v485 = vunpack.c.l.b16 %v421
    %v486 = vunpack.c.l.b16 %v422
    %v487 = vunpack.c.l.b16 %v423
    %v488 = vunpack.c.l.b16 %v424
    %v489 = vunpack.c.l.b16 %v425
    %v490 = vunpack.c.l.b16 %v426
    %v491 = vunpack.c.l.b16 %v427
    %v492 = vunpack.c.l.b16 %v428
    %v493 = vunpack.c.l.b16 %v429
    %v494 = vunpack.c.l.b16 %v430
    %v495 = vunpack.c.l.b16 %v431
    %v496 = vunpack.c.l.b16 %v432
    %v497 = vunpack.c.l.b16 %v433
    %v498 = vunpack.c.l.b16 %v434
    %v499 = vunpack.c.l.b16 %v435
    %v500 = vunpack.c.l.b16 %v436
    %v501 = vunpack.c.l.b16 %v437
    %v502 = vunpack.c.l.b16 %v438
    %v503 = vunpack.c.l.b16 %v439
    %v504 = vunpack.c.l.b16 %v440
    %v505 = vunpack.c.l.b16 %v441
    %v506 = vunpack.c.l.b16 %v442
    %v507 = vunpack.c.l.b16 %v443
    %v508 = vpack.c.b16 %v477, %v476
    %v509 = vpack.c.b16 %v479, %v478
    %v510 = vpack.c.b16 %v481, %v480
    %v511 = vpack.c.b16 %v483, %v482
    %v512 = vpack.c.b16 %v485, %v484
    %v513 = vpack.c.b16 %v487, %v486
    %v514 = vpack.c.b16 %v489, %v488
    %v515 = vpack.c.b16 %v491, %v490
    %v516 = vpack.c.b16 %v493, %v492
    %v517 = vpack.c.b16 %v495, %v494
    %v518 = vpack.c.b16 %v497, %v496
    %v519 = vpack.c.b16 %v499, %v498
    %v520 = vpack.c.b16 %v501, %v500
    %v521 = vpack.c.b16 %v503, %v502
    %v522 = vpack.c.b16 %v505, %v504
    %v523 = vpack.c.b16 %v507, %v506
    %540 = vmatpush.bf16.msra.mxu0 %v515
    %541 = vmatpush.bf16.msra.mxu0 %v514
    %542 = vmatpush.bf16.msra.mxu0 %v513
    %543 = vmatpush.bf16.msra.mxu0 %v512
    %544 = vmatpush.bf16.msra.mxu0 %v511
    %545 = vmatpush.bf16.msra.mxu0 %v510
    %546 = vmatpush.bf16.msra.mxu0 %v509
    %547 = vmatpush.bf16.msra.mxu0 %v508
    %548 = vmatmul.bf16.gmra.mxu0 %v410
    %v549 = vpop.f32.mrf.mxu0
    %v550 = vadd.f32 0.0, %v549
    %v551 = vpop.f32.mrf.mxu0
    %v552 = vadd.f32 0.0, %v551
    %553 = vdwg.mxu0
    %554 = vmatpush.bf16.msra.mxu0 %v523
    %555 = vmatpush.bf16.msra.mxu0 %v522
    %556 = vmatpush.bf16.msra.mxu0 %v521
    %557 = vmatpush.bf16.msra.mxu0 %v520
    %558 = vmatpush.bf16.msra.mxu0 %v519
    %559 = vmatpush.bf16.msra.mxu0 %v518
    %560 = vmatpush.bf16.msra.mxu0 %v517
    %561 = vmatpush.bf16.msra.mxu0 %v516
    %562 = vmatmul.bf16.gmra.mxu0 %v411
    %v563 = vpop.f32.mrf.mxu0
    %v564 = vadd.f32 %v550, %v563
    %v565 = vpop.f32.mrf.mxu0
    %v566 = vadd.f32 %v552, %v565
    %567 = vdwg.mxu0
    %v568 = vadd.f32 %v408, %v564
    %v569 = vadd.f32 %v409, %v566
    %570 = vst [vmem:[#allocation8] sm:$0xff] %v568
    %571 = vst [vmem:[#allocation8 + $0x8] sm:$0xff] %v569
    // Predicated region
    $region30: #{tpu_custom_call.1} parent=1 // pred_check
      _
    $region31: #{tpu_custom_call.1} parent=1 // pred_check_branch
      %573 = sbr.rel (0) target = $region33
    $region32: #{tpu_custom_call.1} parent=1 // pred_region
      %575 = vsyncadd [#allocation4], 0
      %s576 = sshll.u32 [#allocation8], 4
      %s577 = int_to_ptr.vmem [resolvable:$true] %s576
      %s578 = sshll.u32 %s3, 4
      %s579 = int_to_ptr.hbm [resolvable:$true] %s578
      %584 = dma.vmem_to_hbm [thread:$0]  %s577, 256, %s579, [#allocation4], 128, 128, 8
    $region33: #{tpu_custom_call.1} parent=1 // pred_fallthru
      _
    // Predicated region
    $region34: #{tpu_custom_call.1} parent=1 // pred_check
      _
    $region35: #{tpu_custom_call.1} parent=1 // pred_check_branch
      %586 = sbr.rel (0) target = $region37
    $region36: #{tpu_custom_call.1} parent=1 // pred_region
      %588 = dma.done [#allocation4], 256
    $region37: #{tpu_custom_call.1} parent=1 // pred_fallthru
      _
    %589 = vsyncpa [#allocation3], 1
    %590 = vsyncpa [#allocation6], 1
    %591 = vsyncpa [#allocation4], 1

</llo_original>
